<compile_context>
chip_gen: v7x
topology: tpu7x:2x2x1
jax: 0.10.0
libtpu: 0.0.40
codegen_flags: <defaults>
</compile_context>

<pallas_src>
import jax
import jax.numpy as jnp
from jax.experimental import pallas as pl
from jax.experimental.pallas import tpu as pltpu

IN_FEATURES = 360   # K: kept un-padded — it equals the full array dim (legal
                    # BlockSpec) and padding x's feature dim would cost an
                    # extra HBM pass on a mem-bound op.
K_LANES = 384       # 360 rounded up to a lane multiple of 128 (VMEM layout).
LANE = 128
MIB = 1 << 20


def _round_up(v, m):
    return ((v + m - 1) // m) * m


def _sublane_granule(dtype):
    # Sublane packing: f32 -> 8, bf16 -> 16, int8/fp8 -> 32.
    return {4: 8, 2: 16, 1: 32}.get(dtype.itemsize, 8)


def prepare_lr_params(weight, bias, param_dtype=jnp.float32):
    """One-time parameter prep (do NOT call per forward).

    weight: (num_classes, 360)  -- PyTorch nn.Linear layout
    bias:   (num_classes,)
    Returns (wt_pad (360, c_pad) in param_dtype, b_pad (1, c_pad) f32, num_classes).
    The transpose + lane padding is hoisted off the hot path.
    """
    num_classes = weight.shape[0]
    c_pad = _round_up(max(num_classes, LANE), LANE)

    wt = weight.T.astype(param_dtype)                         # (360, C)
    wt_pad = jnp.zeros((IN_FEATURES, c_pad), param_dtype).at[:, :num_classes].set(wt)
    b_pad = jnp.zeros((1, c_pad), jnp.float32).at[0, :num_classes].set(
        bias.astype(jnp.float32)
    )
    return wt_pad, b_pad, num_classes


def lr_kernel(x_ref, wt_ref, b_ref, o_ref):
    # (TB, 360) @ (360, c_pad) on the MXU, f32 accumulation, fused bias add,
    # then a static lane-slice down to num_classes for the store (no separate
    # post-kernel slice / HBM pass).
    acc = jnp.dot(x_ref[...], wt_ref[...], preferred_element_type=jnp.float32)
    acc = acc + b_ref[...]
    o_ref[...] = acc[:, : o_ref.shape[-1]].astype(o_ref.dtype)


def _pick_tile(batch, c_pad, x_dtype, w_dtype, out_dtype, tb, vmem_budget_bytes, tb_cap):
    """Pick the batch tile (rows) and a matching vmem_limit_bytes."""
    x_isz = x_dtype.itemsize
    w_isz = w_dtype.itemsize
    o_isz = out_dtype.itemsize
    granule = _sublane_granule(x_dtype)

    # Grid-invariant VMEM (weight + bias); worst case: double-buffered.
    fixed = 2 * (IN_FEATURES * c_pad * w_isz) + 2 * (8 * c_pad * 4)
    # Per-row VMEM: double-buffered x tile (lane-padded to 384), double-buffered
    # output tile (lane-padded to c_pad inside VMEM), plus the f32 matmul temp.
    per_row = 2 * K_LANES * x_isz + 2 * c_pad * o_isz + c_pad * 4

    if tb is None:
        tb = max(granule, (vmem_budget_bytes - fixed - MIB) // per_row)
        tb = min(tb, tb_cap)
    # (8,128)-rule safety: when B > tb the leading block dim must be a
    # multiple of the sublane granule.
    tb = max(granule, _round_up(int(tb), granule))

    tb_eff = batch if batch <= tb else tb   # full-dim block is always legal
    needed = fixed + tb_eff * per_row
    vmem_limit = int(min(max(needed + 4 * MIB, 32 * MIB), 56 * MIB))
    return tb_eff, vmem_limit


def _dimension_semantics(num_tiles):
    kind = ""
    try:
        kind = jax.devices()[0].device_kind.lower()
    except Exception:
        pass
    if num_tiles >= 2 and (("v7" in kind) or ("tpu7" in kind) or ("7x" in kind)):
        # v7x: 2 TensorCores, each with its own DMA path -> actually split the
        # memory-bound batch axis across both cores.
        return (getattr(pltpu, "CORE_PARALLEL", "parallel"),)
    return ("parallel",)   # near no-op on single-TC v5e/v6e, harmless.


def lr_forward(x, wt_pad, b_pad, num_classes, remove_last_layer=False,
               tb=None, vmem_budget_bytes=40 * MIB, tb_cap=4096):
    """Pallas equivalent of LR.forward.

    x:      (B, 360)  f32 or bf16
    wt_pad: (360, c_pad) from prepare_lr_params
    b_pad:  (1, c_pad) f32 from prepare_lr_params
    """
    if remove_last_layer:
        return x   # identity path, no kernel

    batch = x.shape[0]
    c_pad = wt_pad.shape[1]
    out_dtype = x.dtype

    tb_eff, vmem_limit = _pick_tile(
        batch, c_pad, x.dtype, wt_pad.dtype, out_dtype, tb, vmem_budget_bytes, tb_cap
    )
    num_tiles = pl.cdiv(batch, tb_eff)

    cost = pl.CostEstimate(
        flops=2 * batch * IN_FEATURES * c_pad,
        transcendentals=0,
        bytes_accessed=(
            batch * IN_FEATURES * x.dtype.itemsize          # x read
            + IN_FEATURES * c_pad * wt_pad.dtype.itemsize   # weight read (once)
            + c_pad * 4                                     # bias read
            + batch * num_classes * out_dtype.itemsize      # output write
        ),
    )

    def call(single_buffer_params):
        # Constant index_map -> weight/bias stay VMEM-resident; a single
        # buffer saves one redundant (360, c_pad) copy.
        pkw = dict(pipeline_mode=pl.Buffered(1)) if single_buffer_params else {}
        return pl.pallas_call(
            lr_kernel,
            out_shape=jax.ShapeDtypeStruct((batch, num_classes), out_dtype),
            grid=(num_tiles,),
            in_specs=[
                pl.BlockSpec((tb_eff, IN_FEATURES), lambda i: (i, 0)),
                pl.BlockSpec((IN_FEATURES, c_pad), lambda i: (0, 0), **pkw),
                pl.BlockSpec((1, c_pad), lambda i: (0, 0), **pkw),
            ],
            out_specs=pl.BlockSpec((tb_eff, num_classes), lambda i: (i, 0)),
            compiler_params=pltpu.CompilerParams(
                dimension_semantics=_dimension_semantics(num_tiles),
                vmem_limit_bytes=vmem_limit,
            ),
            cost_estimate=cost,
        )(x, wt_pad, b_pad)

    try:
        return call(single_buffer_params=True)
    except Exception:
        # Some JAX versions reject pipeline_mode on a top-level pallas_call;
        # fall back to default double buffering (already covered by the
        # VMEM budget above).
        return call(single_buffer_params=False)


if __name__ == "__main__":
    key = jax.random.PRNGKey(0)
    k_x, k_w, k_b, k_x2, k_x3 = jax.random.split(key, 5)

    num_classes = 16

    # Deterministic "init": mimic nn.Linear's uniform(+/- 1/sqrt(fan_in)).
    bound = 1.0 / (IN_FEATURES ** 0.5)
    weight = jax.random.uniform(
        k_w, (num_classes, IN_FEATURES), jnp.float32, minval=-bound, maxval=bound
    )
    bias = jax.random.uniform(
        k_b, (num_classes,), jnp.float32, minval=-bound, maxval=bound
    )

    # ---------------- f32 path ----------------
    wt_pad, b_pad, C = prepare_lr_params(weight, bias)

    # Case 1: tiny batch, single grid step (auto tile), direct (B, C) output.
    x = jax.random.normal(k_x, (8, IN_FEATURES), jnp.float32)
    out = jax.block_until_ready(lr_forward(x, wt_pad, b_pad, C))
    ref = x @ weight.T + bias
    assert out.shape == (8, num_classes)
    assert jnp.allclose(out, ref, atol=1e-4, rtol=1e-4)

    # Case 2: multi-step batch grid with a partial last tile (B=20, tb=8 -> grid=3),
    # masked (B, C) output stores.
    x2 = jax.random.normal(k_x2, (20, IN_FEATURES), jnp.float32)
    out2 = jax.block_until_ready(lr_forward(x2, wt_pad, b_pad, C, tb=8))
    ref2 = x2 @ weight.T + bias
    assert out2.shape == (20, num_classes)
    assert jnp.allclose(out2, ref2, atol=1e-4, rtol=1e-4)

    # Case 3: bf16 data path (halved HBM traffic), f32 accumulation in-kernel,
    # bf16 batch tile (granule 16), grid of 2.
    wt_bf, b_pad_bf, _ = prepare_lr_params(weight, bias, param_dtype=jnp.bfloat16)
    x3 = jax.random.normal(k_x3, (32, IN_FEATURES), jnp.float32).astype(jnp.bfloat16)
    out3 = jax.block_until_ready(lr_forward(x3, wt_bf, b_pad_bf, C, tb=16))
    ref3 = (x3.astype(jnp.float32)
            @ weight.astype(jnp.bfloat16).astype(jnp.float32).T + bias)
    assert out3.shape == (32, num_classes)
    assert jnp.allclose(out3.astype(jnp.float32), ref3, atol=5e-2, rtol=5e-2)

    # remove_last_layer=True path is the identity (no kernel).
    passthru = lr_forward(x, wt_pad, b_pad, C, remove_last_layer=True)
    assert jnp.array_equal(passthru, x)

    print("KERNEL_OK")
</pallas_src>

<mosaic_0001>
module attributes {stable_mosaic.version = 11 : i64} {
  func.func @lr_kernel(%arg0: i32, %arg1: memref<8x360xf32, #tpu.memory_space<vmem>>, %arg2: memref<360x128xf32, #tpu.memory_space<vmem>>, %arg3: memref<1x128xf32, #tpu.memory_space<vmem>>, %arg4: memref<8x16xf32, #tpu.memory_space<vmem>>) attributes {dimension_semantics = [#tpu.dimension_semantics<parallel>], iteration_bounds = array<i64: 1>, scalar_prefetch = 0 : i64, scratch_operands = 0 : i64, tpu.core_type = #tpu.core_type<tc>, window_params = [{transform_indices = @transform_0, window_bounds = array<i64: 8, 360>}, {pipeline_mode = #tpu.pipeline_mode<synchronous>, transform_indices = @transform_1, window_bounds = array<i64: 360, 128>}, {pipeline_mode = #tpu.pipeline_mode<synchronous>, transform_indices = @transform_2, window_bounds = array<i64: 1, 128>}, {transform_indices = @transform_3, window_bounds = array<i64: 8, 16>}]} {
    %c0 = arith.constant 0 : index
    %c0_0 = arith.constant 0 : index
    %0 = vector.load %arg1[%c0, %c0_0] : memref<8x360xf32, #tpu.memory_space<vmem>>, vector<8x360xf32>
    %c0_1 = arith.constant 0 : index
    %c0_2 = arith.constant 0 : index
    %1 = vector.load %arg2[%c0_1, %c0_2] : memref<360x128xf32, #tpu.memory_space<vmem>>, vector<360x128xf32>
    %cst = arith.constant dense<0.000000e+00> : vector<8x128xf32>
    %2 = tpu.matmul %0, %1, %cst {dimension_numbers = #tpu.dot_dimension_numbers<[1], [0], [0], [1], [0, 0, 1, 1], [], []>} : vector<8x360xf32>, vector<360x128xf32>, vector<8x128xf32> -> vector<8x128xf32>
    %c0_3 = arith.constant 0 : index
    %c0_4 = arith.constant 0 : index
    %3 = vector.load %arg3[%c0_3, %c0_4] : memref<1x128xf32, #tpu.memory_space<vmem>>, vector<1x128xf32>
    %4 = vector.broadcast %3 : vector<1x128xf32> to vector<8x128xf32>
    %5 = arith.addf %2, %4 : vector<8x128xf32>
    %6 = vector.extract_strided_slice %5 {offsets = [0, 0], sizes = [8, 16], strides = [1, 1]} : vector<8x128xf32> to vector<8x16xf32>
    %c0_5 = arith.constant 0 : index
    %c0_6 = arith.constant 0 : index
    %7 = vector.load %arg4[%c0_5, %c0_6] : memref<8x16xf32, #tpu.memory_space<vmem>>, vector<8x16xf32>
    tpu.vector_store %arg4[%c0_5, %c0_6], %6 {strides = array<i32>} : memref<8x16xf32, #tpu.memory_space<vmem>>, vector<8x16xf32>,
    return
  }
  func.func @transform_0(%arg0: i32) -> (i32, i32) {
    %c0_i32 = arith.constant 0 : i32
    %c0_i32_0 = arith.constant 0 : i32
    return %arg0, %c0_i32 : i32, i32
  }
  func.func @transform_1(%arg0: i32) -> (i32, i32) {
    %c0_i32 = arith.constant 0 : i32
    %c0_i32_0 = arith.constant 0 : i32
    %c0_i32_1 = arith.constant 0 : i32
    return %c0_i32, %c0_i32_0 : i32, i32
  }
  func.func @transform_2(%arg0: i32) -> (i32, i32) {
    %c0_i32 = arith.constant 0 : i32
    %c0_i32_0 = arith.constant 0 : i32
    %c0_i32_1 = arith.constant 0 : i32
    return %c0_i32, %c0_i32_0 : i32, i32
  }
  func.func @transform_3(%arg0: i32) -> (i32, i32) {
    %c0_i32 = arith.constant 0 : i32
    %c0_i32_0 = arith.constant 0 : i32
    return %arg0, %c0_i32 : i32, i32
  }
}

module attributes {stable_mosaic.version = 11 : i64} {
  func.func @lr_kernel(%arg0: i32, %arg1: memref<8x360xf32, #tpu.memory_space<vmem>>, %arg2: memref<360x128xf32, #tpu.memory_space<vmem>>, %arg3: memref<1x128xf32, #tpu.memory_space<vmem>>, %arg4: memref<8x16xf32, #tpu.memory_space<vmem>>) attributes {dimension_semantics = [#tpu.dimension_semantics<parallel>], iteration_bounds = array<i64: 1>, scalar_prefetch = 0 : i64, scratch_operands = 0 : i64, tpu.core_type = #tpu.core_type<tc>, window_params = [{transform_indices = @transform_0, window_bounds = array<i64: 8, 360>}, {pipeline_mode = #tpu.pipeline_mode<synchronous>, transform_indices = @transform_1, window_bounds = array<i64: 360, 128>}, {pipeline_mode = #tpu.pipeline_mode<synchronous>, transform_indices = @transform_2, window_bounds = array<i64: 1, 128>}, {transform_indices = @transform_3, window_bounds = array<i64: 8, 16>}]} {
    %c0 = arith.constant 0 : index
    %c0_0 = arith.constant 0 : index
    %0 = vector.load %arg1[%c0, %c0_0] : memref<8x360xf32, #tpu.memory_space<vmem>>, vector<8x360xf32>
    %c0_1 = arith.constant 0 : index
    %c0_2 = arith.constant 0 : index
    %1 = vector.load %arg2[%c0_1, %c0_2] : memref<360x128xf32, #tpu.memory_space<vmem>>, vector<360x128xf32>
    %cst = arith.constant dense<0.000000e+00> : vector<8x128xf32>
    %2 = tpu.matmul %0, %1, %cst {dimension_numbers = #tpu.dot_dimension_numbers<[1], [0], [0], [1], [0, 0, 1, 1], [], []>} : vector<8x360xf32>, vector<360x128xf32>, vector<8x128xf32> -> vector<8x128xf32>
    %c0_3 = arith.constant 0 : index
    %c0_4 = arith.constant 0 : index
    %3 = vector.load %arg3[%c0_3, %c0_4] : memref<1x128xf32, #tpu.memory_space<vmem>>, vector<1x128xf32>
    %4 = vector.broadcast %3 : vector<1x128xf32> to vector<8x128xf32>
    %5 = arith.addf %2, %4 : vector<8x128xf32>
    %6 = vector.extract_strided_slice %5 {offsets = [0, 0], sizes = [8, 16], strides = [1, 1]} : vector<8x128xf32> to vector<8x16xf32>
    %c0_5 = arith.constant 0 : index
    %c0_6 = arith.constant 0 : index
    %7 = vector.load %arg4[%c0_5, %c0_6] : memref<8x16xf32, #tpu.memory_space<vmem>>, vector<8x16xf32>
    tpu.vector_store %arg4[%c0_5, %c0_6], %6 {strides = array<i32>} : memref<8x16xf32, #tpu.memory_space<vmem>>, vector<8x16xf32>,
    return
  }
  func.func @transform_0(%arg0: i32) -> (i32, i32) {
    %c0_i32 = arith.constant 0 : i32
    %c0_i32_0 = arith.constant 0 : i32
    return %arg0, %c0_i32 : i32, i32
  }
  func.func @transform_1(%arg0: i32) -> (i32, i32) {
    %c0_i32 = arith.constant 0 : i32
    %c0_i32_0 = arith.constant 0 : i32
    %c0_i32_1 = arith.constant 0 : i32
    return %c0_i32, %c0_i32_0 : i32, i32
  }
  func.func @transform_2(%arg0: i32) -> (i32, i32) {
    %c0_i32 = arith.constant 0 : i32
    %c0_i32_0 = arith.constant 0 : i32
    %c0_i32_1 = arith.constant 0 : i32
    return %c0_i32, %c0_i32_0 : i32, i32
  }
  func.func @transform_3(%arg0: i32) -> (i32, i32) {
    %c0_i32 = arith.constant 0 : i32
    %c0_i32_0 = arith.constant 0 : i32
    return %arg0, %c0_i32 : i32, i32
  }
}

</mosaic_0001>

<llo_original>
// kernel: tpu_custom_call.1
$region0: #{tpu_custom_call.1}
  #allocation0 [shape = 'u32[]', space=smem, size = 0x4, offset = 0x4, fixed_abs, tag = 'smem constant byte address 0x4 - core index']
  #allocation1 [shape = 'u32[144,128]{1,0:T(1,128)}', space=vmem, size = 0x12000, scoped, tag = 'internal scratch']
  %s0 = inlined_call_operand.hbm [shape: f32[8,360], index: 0, kind: input, shape index: {}]
  %s1 = inlined_call_operand.hbm [shape: f32[360,128], index: 1, kind: input, shape index: {}]
  %s2 = inlined_call_operand.vmem [shape: f32[1,128], index: 2, kind: input, shape index: {}]
  %s3 = inlined_call_operand.hbm [shape: f32[8,16], index: 3, kind: output, shape index: {}]
  %s4 = sld [smem:[#allocation0]]
  $region30: #{tpu_custom_call.1} parent=0
    _
  %s6 = ssub.s32 1, %s4
  %s7 = scalar_select 0, %s6, %s4
  $region1: #{tpu_custom_call.1} parent=0
    #allocation2 [shape = 'u8[12288]{0}', space=vmem, size = 0x3000, scoped, tag = 'input window, operand 0, single buffered']
    #allocation3 [shape = 's32[1]{0}', space=sflag, size = 0x4, scoped, tag = 'scoped memory for tpu_custom_call.1']
    #allocation4 [shape = 's32[1]{0}', space=sflag, size = 0x4, scoped, tag = 'scoped memory for tpu_custom_call.1']
    #allocation5 [shape = 'u8[184320]{0}', space=vmem, size = 0x2d000, scoped, tag = 'input window, operand 1, single buffered']
    #allocation6 [shape = 's32[1]{0}', space=sflag, size = 0x4, scoped, tag = 'scoped memory for tpu_custom_call.1']
    #allocation7 [shape = 'u8[4096]{0}', space=vmem, size = 0x1000, scoped, tag = 'output window, operand 0, single buffered']
    %8 = vsyncpa [#allocation3], 0
    %9 = vsyncpa [#allocation6], 0
    %10 = vsyncpa [#allocation4], 0
    // Predicated region
    $region2: #{tpu_custom_call.1} parent=1 // pred_check
      _
    $region3: #{tpu_custom_call.1} parent=1 // pred_check_branch
      %12 = sbr.rel (0) target = $region5
    $region4: #{tpu_custom_call.1} parent=1 // pred_region
      %s14 = ssub.s32 384, 384
      %15 = vsyncadd [#allocation3], %s14
      %s17 = sshll.u32 [#allocation2], 4
      %s18 = int_to_ptr.vmem [resolvable:$true] %s17
      %20 = dma.hbm_to_vmem [thread:$0]  %s0, 384, %s18, [#allocation3]
    $region5: #{tpu_custom_call.1} parent=1 // pred_fallthru
      _
    // Predicated region
    $region6: #{tpu_custom_call.1} parent=1 // pred_check
      _
    $region7: #{tpu_custom_call.1} parent=1 // pred_check_branch
      %22 = sbr.rel (0) target = $region9
    $region8: #{tpu_custom_call.1} parent=1 // pred_region
      %s24 = ssub.s32 5760, 5760
      %25 = vsyncadd [#allocation6], %s24
      %s26 = sshll.u32 [#allocation5], 4
      %s27 = int_to_ptr.vmem [resolvable:$true] %s26
      %32 = dma.hbm_to_vmem [thread:$0]  %s1, 5760, %s27, [#allocation6], 128, 128, 8
    $region9: #{tpu_custom_call.1} parent=1 // pred_fallthru
      _
    // Predicated region
    $region10: #{tpu_custom_call.1} parent=1 // pred_check
      _
    $region11: #{tpu_custom_call.1} parent=1 // pred_check_branch
      %34 = sbr.rel (0) target = $region13
    $region12: #{tpu_custom_call.1} parent=1 // pred_region
      _
    $region13: #{tpu_custom_call.1} parent=1 // pred_fallthru
      _
    // Predicated region
    $region14: #{tpu_custom_call.1} parent=1 // pred_check
      _
    $region15: #{tpu_custom_call.1} parent=1 // pred_check_branch
      %36 = sbr.rel (0) target = $region17
    $region16: #{tpu_custom_call.1} parent=1 // pred_region
      %37 = dma.done [#allocation3], 384
    $region17: #{tpu_custom_call.1} parent=1 // pred_fallthru
      _
    // Predicated region
    $region18: #{tpu_custom_call.1} parent=1 // pred_check
      _
    $region19: #{tpu_custom_call.1} parent=1 // pred_check_branch
      %39 = sbr.rel (0) target = $region21
    $region20: #{tpu_custom_call.1} parent=1 // pred_region
      %40 = dma.done [#allocation6], 5760
    $region21: #{tpu_custom_call.1} parent=1 // pred_fallthru
      _
    %v41 = vld [vmem:[#allocation2] sm:$0xff]
    %v42 = vld [vmem:[#allocation2 + $0x8] sm:$0xff]
    %v43 = vld [vmem:[#allocation2 + $0x10] sm:$0xff]
    %v44 = vld [vmem:[#allocation5] sm:$0xff]
    %v45 = vld [vmem:[#allocation5 + $0x8] sm:$0xff]
    %v46 = vld [vmem:[#allocation5 + $0x10] sm:$0xff]
    %v47 = vld [vmem:[#allocation5 + $0x18] sm:$0xff]
    %v48 = vld [vmem:[#allocation5 + $0x20] sm:$0xff]
    %v49 = vld [vmem:[#allocation5 + $0x28] sm:$0xff]
    %v50 = vld [vmem:[#allocation5 + $0x30] sm:$0xff]
    %v51 = vld [vmem:[#allocation5 + $0x38] sm:$0xff]
    %v52 = vld [vmem:[#allocation5 + $0x40] sm:$0xff]
    %v53 = vld [vmem:[#allocation5 + $0x48] sm:$0xff]
    %v54 = vld [vmem:[#allocation5 + $0x50] sm:$0xff]
    %v55 = vld [vmem:[#allocation5 + $0x58] sm:$0xff]
    %v56 = vld [vmem:[#allocation5 + $0x60] sm:$0xff]
    %v57 = vld [vmem:[#allocation5 + $0x68] sm:$0xff]
    %v58 = vld [vmem:[#allocation5 + $0x70] sm:$0xff]
    %v59 = vld [vmem:[#allocation5 + $0x78] sm:$0xff]
    %v60 = vld [vmem:[#allocation5 + $0x80] sm:$0xff]
    %v61 = vld [vmem:[#allocation5 + $0x88] sm:$0xff]
    %v62 = vld [vmem:[#allocation5 + $0x90] sm:$0xff]
    %v63 = vld [vmem:[#allocation5 + $0x98] sm:$0xff]
    %v64 = vld [vmem:[#allocation5 + $0xa0] sm:$0xff]
    %v65 = vld [vmem:[#allocation5 + $0xa8] sm:$0xff]
    %v66 = vld [vmem:[#allocation5 + $0xb0] sm:$0xff]
    %v67 = vld [vmem:[#allocation5 + $0xb8] sm:$0xff]
    %v68 = vld [vmem:[#allocation5 + $0xc0] sm:$0xff]
    %v69 = vld [vmem:[#allocation5 + $0xc8] sm:$0xff]
    %v70 = vld [vmem:[#allocation5 + $0xd0] sm:$0xff]
    %v71 = vld [vmem:[#allocation5 + $0xd8] sm:$0xff]
    %v72 = vld [vmem:[#allocation5 + $0xe0] sm:$0xff]
    %v73 = vld [vmem:[#allocation5 + $0xe8] sm:$0xff]
    %v74 = vld [vmem:[#allocation5 + $0xf0] sm:$0xff]
    %v75 = vld [vmem:[#allocation5 + $0xf8] sm:$0xff]
    %v76 = vld [vmem:[#allocation5 + $0x100] sm:$0xff]
    %v77 = vld [vmem:[#allocation5 + $0x108] sm:$0xff]
    %v78 = vld [vmem:[#allocation5 + $0x110] sm:$0xff]
    %v79 = vld [vmem:[#allocation5 + $0x118] sm:$0xff]
    %v80 = vld [vmem:[#allocation5 + $0x120] sm:$0xff]
    %v81 = vld [vmem:[#allocation5 + $0x128] sm:$0xff]
    %v82 = vld [vmem:[#allocation5 + $0x130] sm:$0xff]
    %v83 = vld [vmem:[#allocation5 + $0x138] sm:$0xff]
    %v84 = vld [vmem:[#allocation5 + $0x140] sm:$0xff]
    %v85 = vld [vmem:[#allocation5 + $0x148] sm:$0xff]
    %v86 = vld [vmem:[#allocation5 + $0x150] sm:$0xff]
    %v87 = vld [vmem:[#allocation5 + $0x158] sm:$0xff]
    %v88 = vld [vmem:[#allocation5 + $0x160] sm:$0xff]
    %v89 = vld [vmem:[%s2] sm:$0x1]
    %v91 = vlaneseq
    %v92 = vshrl.u32 %v91, 7
    %v93 = vsub.s32 0, %v92
    %v94 = vrot.slane %v89, %v93
    %vm96 = vcmask 850944
    %v98 = vsel %vm96, %v43, 0
    %100 = vmatprep.subr.mxu0 0.0
    %101 = vmatpush1.msra.mxu0 %v44
    %102 = vmatprep.subr.mxu0 0.0
    %103 = vmatpush1.msra.mxu0 %v45
    %104 = vmatprep.subr.mxu0 0.0
    %105 = vmatpush1.msra.mxu0 %v46
    %106 = vmatprep.subr.mxu0 0.0
    %107 = vmatpush1.msra.mxu0 %v47
    %108 = vmatprep.subr.mxu0 0.0
    %109 = vmatpush1.msra.mxu0 %v48
    %110 = vmatprep.subr.mxu0 0.0
    %111 = vmatpush1.msra.mxu0 %v49
    %112 = vmatprep.subr.mxu0 0.0
    %113 = vmatpush1.msra.mxu0 %v50
    %114 = vmatprep.subr.mxu0 0.0
    %115 = vmatpush1.msra.mxu0 %v51
    %116 = vmatprep.subr.mxu0 0.0
    %117 = vmatpush1.msra.mxu0 %v52
    %118 = vmatprep.subr.mxu0 0.0
    %119 = vmatpush1.msra.mxu0 %v53
    %120 = vmatprep.subr.mxu0 0.0
    %121 = vmatpush1.msra.mxu0 %v54
    %122 = vmatprep.subr.mxu0 0.0
    %123 = vmatpush1.msra.mxu0 %v55
    %124 = vmatprep.subr.mxu0 0.0
    %125 = vmatpush1.msra.mxu0 %v56
    %126 = vmatprep.subr.mxu0 0.0
    %127 = vmatpush1.msra.mxu0 %v57
    %128 = vmatprep.subr.mxu0 0.0
    %129 = vmatpush1.msra.mxu0 %v58
    %130 = vmatprep.subr.mxu0 0.0
    %131 = vmatpush1.msra.mxu0 %v59
    %132 = vmatprep.subr.mxu0 0.0
    %133 = vmatpush1.msra.mxu0 %v60
    %134 = vmatprep.subr.mxu0 0.0
    %135 = vmatpush1.msra.mxu0 %v61
    %136 = vmatprep.subr.mxu0 0.0
    %137 = vmatpush1.msra.mxu0 %v62
    %138 = vmatprep.subr.mxu0 0.0
    %139 = vmatpush1.msra.mxu0 %v63
    %140 = vmatprep.subr.mxu0 0.0
    %141 = vmatpush1.msra.mxu0 %v64
    %142 = vmatprep.subr.mxu0 0.0
    %143 = vmatpush1.msra.mxu0 %v65
    %144 = vmatprep.subr.mxu0 0.0
    %145 = vmatpush1.msra.mxu0 %v66
    %146 = vmatprep.subr.mxu0 0.0
    %147 = vmatpush1.msra.mxu0 %v67
    %148 = vmatprep.subr.mxu0 0.0
    %149 = vmatpush1.msra.mxu0 %v68
    %150 = vmatprep.subr.mxu0 0.0
    %151 = vmatpush1.msra.mxu0 %v69
    %152 = vmatprep.subr.mxu0 0.0
    %153 = vmatpush1.msra.mxu0 %v70
    %154 = vmatprep.subr.mxu0 0.0
    %155 = vmatpush1.msra.mxu0 %v71
    %156 = vmatprep.subr.mxu0 0.0
    %157 = vmatpush1.msra.mxu0 %v72
    %158 = vmatprep.subr.mxu0 0.0
    %159 = vmatpush1.msra.mxu0 %v73
    %160 = vmatprep.subr.mxu0 0.0
    %161 = vmatpush1.msra.mxu0 %v74
    %162 = vmatprep.subr.mxu0 0.0
    %163 = vmatpush1.msra.mxu0 %v75
    %164 = vmatprep.mubr.f32.mxu0 %v42
    %165 = vmatmul.mubr.f32.gmra.mrb[0].mxu0 %v41
    %v166 = vpop.f32.mrb[0].mxu0
    %v167 = vadd.f32 %v94, %v166
    %v168 = vpop.f32.mrb[0].mxu0
    %169 = vdwg.mxu0
    %170 = vmatprep.subr.mxu0 0.0
    %171 = vmatpush1.msra.mxu0 %v76
    %172 = vmatprep.subr.mxu0 0.0
    %173 = vmatpush1.msra.mxu0 %v77
    %174 = vmatprep.subr.mxu0 0.0
    %175 = vmatpush1.msra.mxu0 %v78
    %176 = vmatprep.subr.mxu0 0.0
    %177 = vmatpush1.msra.mxu0 %v79
    %178 = vmatprep.subr.mxu0 0.0
    %179 = vmatpush1.msra.mxu0 %v80
    %180 = vmatprep.subr.mxu0 0.0
    %181 = vmatpush1.msra.mxu0 %v81
    %182 = vmatprep.subr.mxu0 0.0
    %183 = vmatpush1.msra.mxu0 %v82
    %184 = vmatprep.subr.mxu0 0.0
    %185 = vmatpush1.msra.mxu0 %v83
    %186 = vmatprep.subr.mxu0 0.0
    %187 = vmatpush1.msra.mxu0 %v84
    %188 = vmatprep.subr.mxu0 0.0
    %189 = vmatpush1.msra.mxu0 %v85
    %190 = vmatprep.subr.mxu0 0.0
    %191 = vmatpush1.msra.mxu0 %v86
    %192 = vmatprep.subr.mxu0 0.0
    %193 = vmatpush1.msra.mxu0 %v87
    %194 = vmatprep.subr.mxu0 0.0
    %195 = vmatpush1.msra.mxu0 %v88
    %196 = vmatprep.subr.mxu0 0.0
    %197 = vmatpush1.msra.mxu0 0.0
    %198 = vmatprep.subr.mxu0 0.0
    %199 = vmatpush1.msra.mxu0 0.0
    %200 = vmatprep.subr.mxu0 0.0
    %201 = vmatpush1.msra.mxu0 0.0
    %202 = vmatprep.subr.mxu0 0.0
    %203 = vmatpush1.msra.mxu0 0.0
    %204 = vmatprep.subr.mxu0 0.0
    %205 = vmatpush1.msra.mxu0 0.0
    %206 = vmatprep.subr.mxu0 0.0
    %207 = vmatpush1.msra.mxu0 0.0
    %208 = vmatprep.subr.mxu0 0.0
    %209 = vmatpush1.msra.mxu0 0.0
    %210 = vmatprep.subr.mxu0 0.0
    %211 = vmatpush1.msra.mxu0 0.0
    %212 = vmatprep.subr.mxu0 0.0
    %213 = vmatpush1.msra.mxu0 0.0
    %214 = vmatprep.subr.mxu0 0.0
    %215 = vmatpush1.msra.mxu0 0.0
    %216 = vmatprep.subr.mxu0 0.0
    %217 = vmatpush1.msra.mxu0 0.0
    %218 = vmatprep.subr.mxu0 0.0
    %219 = vmatpush1.msra.mxu0 0.0
    %220 = vmatprep.subr.mxu0 0.0
    %221 = vmatpush1.msra.mxu0 0.0
    %222 = vmatprep.subr.mxu0 0.0
    %223 = vmatpush1.msra.mxu0 0.0
    %224 = vmatprep.subr.mxu0 0.0
    %225 = vmatpush1.msra.mxu0 0.0
    %226 = vmatprep.subr.mxu0 0.0
    %227 = vmatpush1.msra.mxu0 0.0
    %228 = vmatprep.subr.mxu0 0.0
    %229 = vmatpush1.msra.mxu0 0.0
    %230 = vmatprep.subr.mxu0 0.0
    %231 = vmatpush1.msra.mxu0 0.0
    %232 = vmatprep.subr.mxu0 0.0
    %233 = vmatpush1.msra.mxu0 0.0
    %234 = vmatprep.mubr.f32.mxu0 0.0
    %235 = vmatmul.mubr.f32.gmra.mrb[0].mxu0 %v98
    %v236 = vpop.f32.mrb[0].mxu0
    %v237 = vadd.f32 %v167, %v236
    %v238 = vpop.f32.mrb[0].mxu0
    %239 = vdwg.mxu0
    %vm240 = vcmask 130048
    %241 = vst.msk [vmem:[#allocation7] sm:$0xff] %vm240, %v237
    // Predicated region
    $region22: #{tpu_custom_call.1} parent=1 // pred_check
      _
    $region23: #{tpu_custom_call.1} parent=1 // pred_check_branch
      %243 = sbr.rel (0) target = $region25
    $region24: #{tpu_custom_call.1} parent=1 // pred_region
      %s245 = ssub.s32 128, 128
      %246 = vsyncadd [#allocation4], %s245
      %s248 = sshll.u32 [#allocation7], 4
      %s249 = int_to_ptr.vmem [resolvable:$true] %s248
      %251 = dma.vmem_to_hbm [thread:$0]  %s249, 128, %s3, [#allocation4]
    $region25: #{tpu_custom_call.1} parent=1 // pred_fallthru
      _
    // Predicated region
    $region26: #{tpu_custom_call.1} parent=1 // pred_check
      _
    $region27: #{tpu_custom_call.1} parent=1 // pred_check_branch
      %253 = sbr.rel (0) target = $region29
    $region28: #{tpu_custom_call.1} parent=1 // pred_region
      %254 = dma.done [#allocation4], 128
    $region29: #{tpu_custom_call.1} parent=1 // pred_fallthru
      _
    %255 = vsyncpa [#allocation3], 1
    %256 = vsyncpa [#allocation6], 1
    %257 = vsyncpa [#allocation4], 1

// kernel: tpu_custom_call.1
$region0: #{tpu_custom_call.1}
  #allocation0 [shape = 'u32[]', space=smem, size = 0x4, offset = 0x4, fixed_abs, tag = 'smem constant byte address 0x4 - core index']
  #allocation1 [shape = 'u32[144,128]{1,0:T(1,128)}', space=vmem, size = 0x12000, scoped, tag = 'internal scratch']
  %s0 = inlined_call_operand.hbm [shape: f32[8,360], index: 0, kind: input, shape index: {}]
  %s1 = inlined_call_operand.hbm [shape: f32[360,128], index: 1, kind: input, shape index: {}]
  %s2 = inlined_call_operand.vmem [shape: f32[1,128], index: 2, kind: input, shape index: {}]
  %s3 = inlined_call_operand.hbm [shape: f32[8,16], index: 3, kind: output, shape index: {}]
  %s4 = sld [smem:[#allocation0]]
  $region30: #{tpu_custom_call.1} parent=0
    _
  %s6 = ssub.s32 1, %s4
  %s7 = scalar_select 0, %s6, %s4
  $region1: #{tpu_custom_call.1} parent=0
    #allocation2 [shape = 'u8[12288]{0}', space=vmem, size = 0x3000, scoped, tag = 'input window, operand 0, single buffered']
    #allocation3 [shape = 's32[1]{0}', space=sflag, size = 0x4, scoped, tag = 'scoped memory for tpu_custom_call.1']
    #allocation4 [shape = 's32[1]{0}', space=sflag, size = 0x4, scoped, tag = 'scoped memory for tpu_custom_call.1']
    #allocation5 [shape = 'u8[184320]{0}', space=vmem, size = 0x2d000, scoped, tag = 'input window, operand 1, single buffered']
    #allocation6 [shape = 's32[1]{0}', space=sflag, size = 0x4, scoped, tag = 'scoped memory for tpu_custom_call.1']
    #allocation7 [shape = 'u8[4096]{0}', space=vmem, size = 0x1000, scoped, tag = 'output window, operand 0, single buffered']
    %8 = vsyncpa [#allocation3], 0
    %9 = vsyncpa [#allocation6], 0
    %10 = vsyncpa [#allocation4], 0
    // Predicated region
    $region2: #{tpu_custom_call.1} parent=1 // pred_check
      _
    $region3: #{tpu_custom_call.1} parent=1 // pred_check_branch
      %12 = sbr.rel (0) target = $region5
    $region4: #{tpu_custom_call.1} parent=1 // pred_region
      %s14 = ssub.s32 384, 384
      %15 = vsyncadd [#allocation3], %s14
      %s17 = sshll.u32 [#allocation2], 4
      %s18 = int_to_ptr.vmem [resolvable:$true] %s17
      %20 = dma.hbm_to_vmem [thread:$0]  %s0, 384, %s18, [#allocation3]
    $region5: #{tpu_custom_call.1} parent=1 // pred_fallthru
      _
    // Predicated region
    $region6: #{tpu_custom_call.1} parent=1 // pred_check
      _
    $region7: #{tpu_custom_call.1} parent=1 // pred_check_branch
      %22 = sbr.rel (0) target = $region9
    $region8: #{tpu_custom_call.1} parent=1 // pred_region
      %s24 = ssub.s32 5760, 5760
      %25 = vsyncadd [#allocation6], %s24
      %s26 = sshll.u32 [#allocation5], 4
      %s27 = int_to_ptr.vmem [resolvable:$true] %s26
      %32 = dma.hbm_to_vmem [thread:$0]  %s1, 5760, %s27, [#allocation6], 128, 128, 8
    $region9: #{tpu_custom_call.1} parent=1 // pred_fallthru
      _
    // Predicated region
    $region10: #{tpu_custom_call.1} parent=1 // pred_check
      _
    $region11: #{tpu_custom_call.1} parent=1 // pred_check_branch
      %34 = sbr.rel (0) target = $region13
    $region12: #{tpu_custom_call.1} parent=1 // pred_region
      _
    $region13: #{tpu_custom_call.1} parent=1 // pred_fallthru
      _
    // Predicated region
    $region14: #{tpu_custom_call.1} parent=1 // pred_check
      _
    $region15: #{tpu_custom_call.1} parent=1 // pred_check_branch
      %36 = sbr.rel (0) target = $region17
    $region16: #{tpu_custom_call.1} parent=1 // pred_region
      %37 = dma.done [#allocation3], 384
    $region17: #{tpu_custom_call.1} parent=1 // pred_fallthru
      _
    // Predicated region
    $region18: #{tpu_custom_call.1} parent=1 // pred_check
      _
    $region19: #{tpu_custom_call.1} parent=1 // pred_check_branch
      %39 = sbr.rel (0) target = $region21
    $region20: #{tpu_custom_call.1} parent=1 // pred_region
      %40 = dma.done [#allocation6], 5760
    $region21: #{tpu_custom_call.1} parent=1 // pred_fallthru
      _
    %v41 = vld [vmem:[#allocation2] sm:$0xff]
    %v42 = vld [vmem:[#allocation2 + $0x8] sm:$0xff]
    %v43 = vld [vmem:[#allocation2 + $0x10] sm:$0xff]
    %v44 = vld [vmem:[#allocation5] sm:$0xff]
    %v45 = vld [vmem:[#allocation5 + $0x8] sm:$0xff]
    %v46 = vld [vmem:[#allocation5 + $0x10] sm:$0xff]
    %v47 = vld [vmem:[#allocation5 + $0x18] sm:$0xff]
    %v48 = vld [vmem:[#allocation5 + $0x20] sm:$0xff]
    %v49 = vld [vmem:[#allocation5 + $0x28] sm:$0xff]
    %v50 = vld [vmem:[#allocation5 + $0x30] sm:$0xff]
    %v51 = vld [vmem:[#allocation5 + $0x38] sm:$0xff]
    %v52 = vld [vmem:[#allocation5 + $0x40] sm:$0xff]
    %v53 = vld [vmem:[#allocation5 + $0x48] sm:$0xff]
    %v54 = vld [vmem:[#allocation5 + $0x50] sm:$0xff]
    %v55 = vld [vmem:[#allocation5 + $0x58] sm:$0xff]
    %v56 = vld [vmem:[#allocation5 + $0x60] sm:$0xff]
    %v57 = vld [vmem:[#allocation5 + $0x68] sm:$0xff]
    %v58 = vld [vmem:[#allocation5 + $0x70] sm:$0xff]
    %v59 = vld [vmem:[#allocation5 + $0x78] sm:$0xff]
    %v60 = vld [vmem:[#allocation5 + $0x80] sm:$0xff]
    %v61 = vld [vmem:[#allocation5 + $0x88] sm:$0xff]
    %v62 = vld [vmem:[#allocation5 + $0x90] sm:$0xff]
    %v63 = vld [vmem:[#allocation5 + $0x98] sm:$0xff]
    %v64 = vld [vmem:[#allocation5 + $0xa0] sm:$0xff]
    %v65 = vld [vmem:[#allocation5 + $0xa8] sm:$0xff]
    %v66 = vld [vmem:[#allocation5 + $0xb0] sm:$0xff]
    %v67 = vld [vmem:[#allocation5 + $0xb8] sm:$0xff]
    %v68 = vld [vmem:[#allocation5 + $0xc0] sm:$0xff]
    %v69 = vld [vmem:[#allocation5 + $0xc8] sm:$0xff]
    %v70 = vld [vmem:[#allocation5 + $0xd0] sm:$0xff]
    %v71 = vld [vmem:[#allocation5 + $0xd8] sm:$0xff]
    %v72 = vld [vmem:[#allocation5 + $0xe0] sm:$0xff]
    %v73 = vld [vmem:[#allocation5 + $0xe8] sm:$0xff]
    %v74 = vld [vmem:[#allocation5 + $0xf0] sm:$0xff]
    %v75 = vld [vmem:[#allocation5 + $0xf8] sm:$0xff]
    %v76 = vld [vmem:[#allocation5 + $0x100] sm:$0xff]
    %v77 = vld [vmem:[#allocation5 + $0x108] sm:$0xff]
    %v78 = vld [vmem:[#allocation5 + $0x110] sm:$0xff]
    %v79 = vld [vmem:[#allocation5 + $0x118] sm:$0xff]
    %v80 = vld [vmem:[#allocation5 + $0x120] sm:$0xff]
    %v81 = vld [vmem:[#allocation5 + $0x128] sm:$0xff]
    %v82 = vld [vmem:[#allocation5 + $0x130] sm:$0xff]
    %v83 = vld [vmem:[#allocation5 + $0x138] sm:$0xff]
    %v84 = vld [vmem:[#allocation5 + $0x140] sm:$0xff]
    %v85 = vld [vmem:[#allocation5 + $0x148] sm:$0xff]
    %v86 = vld [vmem:[#allocation5 + $0x150] sm:$0xff]
    %v87 = vld [vmem:[#allocation5 + $0x158] sm:$0xff]
    %v88 = vld [vmem:[#allocation5 + $0x160] sm:$0xff]
    %v89 = vld [vmem:[%s2] sm:$0x1]
    %v91 = vlaneseq
    %v92 = vshrl.u32 %v91, 7
    %v93 = vsub.s32 0, %v92
    %v94 = vrot.slane %v89, %v93
    %vm96 = vcmask 850944
    %v98 = vsel %vm96, %v43, 0
    %100 = vmatprep.subr.mxu0 0.0
    %101 = vmatpush1.msra.mxu0 %v44
    %102 = vmatprep.subr.mxu0 0.0
    %103 = vmatpush1.msra.mxu0 %v45
    %104 = vmatprep.subr.mxu0 0.0
    %105 = vmatpush1.msra.mxu0 %v46
    %106 = vmatprep.subr.mxu0 0.0
    %107 = vmatpush1.msra.mxu0 %v47
    %108 = vmatprep.subr.mxu0 0.0
    %109 = vmatpush1.msra.mxu0 %v48
    %110 = vmatprep.subr.mxu0 0.0
    %111 = vmatpush1.msra.mxu0 %v49
    %112 = vmatprep.subr.mxu0 0.0
    %113 = vmatpush1.msra.mxu0 %v50
    %114 = vmatprep.subr.mxu0 0.0
    %115 = vmatpush1.msra.mxu0 %v51
    %116 = vmatprep.subr.mxu0 0.0
    %117 = vmatpush1.msra.mxu0 %v52
    %118 = vmatprep.subr.mxu0 0.0
    %119 = vmatpush1.msra.mxu0 %v53
    %120 = vmatprep.subr.mxu0 0.0
    %121 = vmatpush1.msra.mxu0 %v54
    %122 = vmatprep.subr.mxu0 0.0
    %123 = vmatpush1.msra.mxu0 %v55
    %124 = vmatprep.subr.mxu0 0.0
    %125 = vmatpush1.msra.mxu0 %v56
    %126 = vmatprep.subr.mxu0 0.0
    %127 = vmatpush1.msra.mxu0 %v57
    %128 = vmatprep.subr.mxu0 0.0
    %129 = vmatpush1.msra.mxu0 %v58
    %130 = vmatprep.subr.mxu0 0.0
    %131 = vmatpush1.msra.mxu0 %v59
    %132 = vmatprep.subr.mxu0 0.0
    %133 = vmatpush1.msra.mxu0 %v60
    %134 = vmatprep.subr.mxu0 0.0
    %135 = vmatpush1.msra.mxu0 %v61
    %136 = vmatprep.subr.mxu0 0.0
    %137 = vmatpush1.msra.mxu0 %v62
    %138 = vmatprep.subr.mxu0 0.0
    %139 = vmatpush1.msra.mxu0 %v63
    %140 = vmatprep.subr.mxu0 0.0
    %141 = vmatpush1.msra.mxu0 %v64
    %142 = vmatprep.subr.mxu0 0.0
    %143 = vmatpush1.msra.mxu0 %v65
    %144 = vmatprep.subr.mxu0 0.0
    %145 = vmatpush1.msra.mxu0 %v66
    %146 = vmatprep.subr.mxu0 0.0
    %147 = vmatpush1.msra.mxu0 %v67
    %148 = vmatprep.subr.mxu0 0.0
    %149 = vmatpush1.msra.mxu0 %v68
    %150 = vmatprep.subr.mxu0 0.0
    %151 = vmatpush1.msra.mxu0 %v69
    %152 = vmatprep.subr.mxu0 0.0
    %153 = vmatpush1.msra.mxu0 %v70
    %154 = vmatprep.subr.mxu0 0.0
    %155 = vmatpush1.msra.mxu0 %v71
    %156 = vmatprep.subr.mxu0 0.0
    %157 = vmatpush1.msra.mxu0 %v72
    %158 = vmatprep.subr.mxu0 0.0
    %159 = vmatpush1.msra.mxu0 %v73
    %160 = vmatprep.subr.mxu0 0.0
    %161 = vmatpush1.msra.mxu0 %v74
    %162 = vmatprep.subr.mxu0 0.0
    %163 = vmatpush1.msra.mxu0 %v75
    %164 = vmatprep.mubr.f32.mxu0 %v42
    %165 = vmatmul.mubr.f32.gmra.mrb[0].mxu0 %v41
    %v166 = vpop.f32.mrb[0].mxu0
    %v167 = vadd.f32 %v94, %v166
    %v168 = vpop.f32.mrb[0].mxu0
    %169 = vdwg.mxu0
    %170 = vmatprep.subr.mxu0 0.0
    %171 = vmatpush1.msra.mxu0 %v76
    %172 = vmatprep.subr.mxu0 0.0
    %173 = vmatpush1.msra.mxu0 %v77
    %174 = vmatprep.subr.mxu0 0.0
    %175 = vmatpush1.msra.mxu0 %v78
    %176 = vmatprep.subr.mxu0 0.0
    %177 = vmatpush1.msra.mxu0 %v79
    %178 = vmatprep.subr.mxu0 0.0
    %179 = vmatpush1.msra.mxu0 %v80
    %180 = vmatprep.subr.mxu0 0.0
    %181 = vmatpush1.msra.mxu0 %v81
    %182 = vmatprep.subr.mxu0 0.0
    %183 = vmatpush1.msra.mxu0 %v82
    %184 = vmatprep.subr.mxu0 0.0
    %185 = vmatpush1.msra.mxu0 %v83
    %186 = vmatprep.subr.mxu0 0.0
    %187 = vmatpush1.msra.mxu0 %v84
    %188 = vmatprep.subr.mxu0 0.0
    %189 = vmatpush1.msra.mxu0 %v85
    %190 = vmatprep.subr.mxu0 0.0
    %191 = vmatpush1.msra.mxu0 %v86
    %192 = vmatprep.subr.mxu0 0.0
    %193 = vmatpush1.msra.mxu0 %v87
    %194 = vmatprep.subr.mxu0 0.0
    %195 = vmatpush1.msra.mxu0 %v88
    %196 = vmatprep.subr.mxu0 0.0
    %197 = vmatpush1.msra.mxu0 0.0
    %198 = vmatprep.subr.mxu0 0.0
    %199 = vmatpush1.msra.mxu0 0.0
    %200 = vmatprep.subr.mxu0 0.0
    %201 = vmatpush1.msra.mxu0 0.0
    %202 = vmatprep.subr.mxu0 0.0
    %203 = vmatpush1.msra.mxu0 0.0
    %204 = vmatprep.subr.mxu0 0.0
    %205 = vmatpush1.msra.mxu0 0.0
    %206 = vmatprep.subr.mxu0 0.0
    %207 = vmatpush1.msra.mxu0 0.0
    %208 = vmatprep.subr.mxu0 0.0
    %209 = vmatpush1.msra.mxu0 0.0
    %210 = vmatprep.subr.mxu0 0.0
    %211 = vmatpush1.msra.mxu0 0.0
    %212 = vmatprep.subr.mxu0 0.0
    %213 = vmatpush1.msra.mxu0 0.0
    %214 = vmatprep.subr.mxu0 0.0
    %215 = vmatpush1.msra.mxu0 0.0
    %216 = vmatprep.subr.mxu0 0.0
    %217 = vmatpush1.msra.mxu0 0.0
    %218 = vmatprep.subr.mxu0 0.0
    %219 = vmatpush1.msra.mxu0 0.0
    %220 = vmatprep.subr.mxu0 0.0
    %221 = vmatpush1.msra.mxu0 0.0
    %222 = vmatprep.subr.mxu0 0.0
    %223 = vmatpush1.msra.mxu0 0.0
    %224 = vmatprep.subr.mxu0 0.0
    %225 = vmatpush1.msra.mxu0 0.0
    %226 = vmatprep.subr.mxu0 0.0
    %227 = vmatpush1.msra.mxu0 0.0
    %228 = vmatprep.subr.mxu0 0.0
    %229 = vmatpush1.msra.mxu0 0.0
    %230 = vmatprep.subr.mxu0 0.0
    %231 = vmatpush1.msra.mxu0 0.0
    %232 = vmatprep.subr.mxu0 0.0
    %233 = vmatpush1.msra.mxu0 0.0
    %234 = vmatprep.mubr.f32.mxu0 0.0
    %235 = vmatmul.mubr.f32.gmra.mrb[0].mxu0 %v98
    %v236 = vpop.f32.mrb[0].mxu0
    %v237 = vadd.f32 %v167, %v236
    %v238 = vpop.f32.mrb[0].mxu0
    %239 = vdwg.mxu0
    %vm240 = vcmask 130048
    %241 = vst.msk [vmem:[#allocation7] sm:$0xff] %vm240, %v237
    // Predicated region
    $region22: #{tpu_custom_call.1} parent=1 // pred_check
      _
    $region23: #{tpu_custom_call.1} parent=1 // pred_check_branch
      %243 = sbr.rel (0) target = $region25
    $region24: #{tpu_custom_call.1} parent=1 // pred_region
      %s245 = ssub.s32 128, 128
      %246 = vsyncadd [#allocation4], %s245
      %s248 = sshll.u32 [#allocation7], 4
      %s249 = int_to_ptr.vmem [resolvable:$true] %s248
      %251 = dma.vmem_to_hbm [thread:$0]  %s249, 128, %s3, [#allocation4]
    $region25: #{tpu_custom_call.1} parent=1 // pred_fallthru
      _
    // Predicated region
    $region26: #{tpu_custom_call.1} parent=1 // pred_check
      _
    $region27: #{tpu_custom_call.1} parent=1 // pred_check_branch
      %253 = sbr.rel (0) target = $region29
    $region28: #{tpu_custom_call.1} parent=1 // pred_region
      %254 = dma.done [#allocation4], 128
    $region29: #{tpu_custom_call.1} parent=1 // pred_fallthru
      _
    %255 = vsyncpa [#allocation3], 1
    %256 = vsyncpa [#allocation6], 1
    %257 = vsyncpa [#allocation4], 1

</llo_original>
